<compile_context>
chip_gen: v6e
topology: v6e:2x2x1
jax: 0.10.0
libtpu: 0.0.40
codegen_flags: <defaults>
</compile_context>

<pallas_src>
from functools import partial

import numpy as np
import jax
import jax.numpy as jnp
from jax.experimental import pallas as pl
from jax.experimental.pallas import tpu as pltpu

# ---- model hyper-params (from the PyTorch module) ----
HIDDEN_SIZE = 2
INPUT_SIZE = 1
N_STEPS = 4
NUM_CLASSES = 1
NUM_LAYERS = 1  # single layer, as in the module

# ---- TPU packing ----
H_SUB = 32                 # lanes reserved per gate (real hidden = 2)
G_LANES = 4 * H_SUB        # i, f, g, o packed into one 128-lane tile
P_ROWS = 8                 # all params packed into one (8, 128) tile (one vreg)
MAX_B_BLK = 512            # max padded batch rows per grid step

# packed-parameter tile row indices
ROW_WIH, ROW_BIAS, ROW_WHH0, ROW_WHH1 = 0, 1, 2, 3
ROW_GSCALE, ROW_GOFF, ROW_WFC, ROW_BFC = 4, 5, 6, 7

# PyTorch gate order: i, f, g, o.  sigmoid(z) = 0.5*tanh(z/2) + 0.5 -> fold the
# 0.5 pre-scale into the i/f/o weight/bias columns, recover with out-scale/offset.
GATE_PRE_SCALE = (0.5, 0.5, 1.0, 0.5)
GATE_OUT_SCALE = (0.5, 0.5, 1.0, 0.5)
GATE_OUT_OFFSET = (0.5, 0.5, 0.0, 0.5)


def lstm_kernel(x_ref, p_ref, out_ref):
    """One batch block.

    x_ref   : (B_BLK, N_STEPS)   batch on sublanes, time step on lanes
    p_ref   : (P_ROWS, G_LANES)  packed params (one vreg; see ROW_* above)
    out_ref : (B_BLK, G_LANES)   fc output replicated across all 128 lanes
    """
    p = p_ref[...]
    wih    = p[ROW_WIH:ROW_WIH + 1, :]
    bias   = p[ROW_BIAS:ROW_BIAS + 1, :]
    whh0   = p[ROW_WHH0:ROW_WHH0 + 1, :]
    whh1   = p[ROW_WHH1:ROW_WHH1 + 1, :]
    gscale = p[ROW_GSCALE:ROW_GSCALE + 1, :]
    goff   = p[ROW_GOFF:ROW_GOFF + 1, :]
    wfc    = p[ROW_WFC:ROW_WFC + 1, :]
    bfc    = p[ROW_BFC:ROW_BFC + 1, :]

    x = x_ref[...]                                           # (B, T)
    b_blk = x.shape[0]

    # Input projection + bias for all T steps, hoisted off the h-dependence chain.
    # input_size == 1 -> a lane-broadcast FMA per step (pure VPU, no MXU).
    xg = [x[:, t:t + 1] * wih + bias for t in range(N_STEPS)]   # each (B, 128)

    c = jnp.zeros((b_blk, G_LANES), jnp.float32)             # c_0 = 0
    h = jnp.zeros((b_blk, G_LANES), jnp.float32)
    h0 = jnp.zeros((b_blk, 1), jnp.float32)                  # h_0 = 0
    h1 = jnp.zeros((b_blk, 1), jnp.float32)

    # Recurrence, statically unrolled (T = 4).  Per step: 2 lane-broadcast FMAs
    # (h·W_hh^T as a 2-term outer product), ONE full-vreg tanh + per-lane FMA to
    # recover all four gates, 3 XLU rolls to align gate blocks, one tanh(c).
    # Padded-lane invariant: zero weight/bias columns -> pre = 0 -> tanh = 0 ->
    # gate = offset (0.5 on i/f/o lanes, 0 on g lanes); since c starts at 0,
    # padded lanes of c and h stay exactly 0 (0.5 * 0), and wfc is zero outside
    # lanes [0, HIDDEN_SIZE), so only lanes 0..1 ever feed the output.
    for t in range(N_STEPS):
        pre = xg[t] + h0 * whh0 + h1 * whh1                  # (B, 128)
        gates = jnp.tanh(pre) * gscale + goff                # i|f|g|o in 32-lane blocks
        f_g = pltpu.roll(gates, 96, 1)                       # f block -> lanes [0, 32)
        g_g = pltpu.roll(gates, 64, 1)                       # g block -> lanes [0, 32)
        o_g = pltpu.roll(gates, 32, 1)                       # o block -> lanes [0, 32)
        c = f_g * c + gates * g_g                            # i already at lanes [0, 32)
        h = o_g * jnp.tanh(c)
        h0 = h[:, 0:1]
        h1 = h[:, 1:2]

    # FC head: real hidden size is 2 -> VPU multiply + cross-lane reduce (XLU),
    # no matmul.  Bias replicated across all lanes -> lane-dense unmasked store.
    red = jnp.sum(h * wfc, axis=-1, keepdims=True)           # (B, 1)
    out_ref[...] = red + bfc                                 # (B, 128)


def pack_params(params):
    """One-time host-side packing of PyTorch-layout params into one (8,128) tile."""
    w_ih, w_hh, b_ih, b_hh, w_fc, b_fc = [np.asarray(p, np.float32) for p in params]
    p = np.zeros((P_ROWS, G_LANES), np.float32)
    for g in range(4):
        rows = slice(g * HIDDEN_SIZE, (g + 1) * HIDDEN_SIZE)
        cols = slice(g * H_SUB, g * H_SUB + HIDDEN_SIZE)
        blk = slice(g * H_SUB, (g + 1) * H_SUB)
        s = GATE_PRE_SCALE[g]
        p[ROW_WIH, cols] = s * w_ih[rows, 0]                  # input_size == 1
        p[ROW_BIAS, cols] = s * (b_ih[rows] + b_hh[rows])
        p[ROW_WHH0, cols] = s * w_hh[rows, 0]                 # coeff of h[:, 0]
        p[ROW_WHH1, cols] = s * w_hh[rows, 1]                 # coeff of h[:, 1]
        p[ROW_GSCALE, blk] = GATE_OUT_SCALE[g]
        p[ROW_GOFF, blk] = GATE_OUT_OFFSET[g]
    p[ROW_WFC, :HIDDEN_SIZE] = w_fc[0, :]                     # NUM_CLASSES == 1
    p[ROW_BFC, :] = float(b_fc[0])
    return p


def _choose_blocks(batch):
    """Pick (rows per block, number of blocks): one big block up to MAX_B_BLK."""
    b_pad = max(8, ((batch + 7) // 8) * 8)
    if b_pad <= MAX_B_BLK:
        return b_pad, 1
    n_blocks = (b_pad + MAX_B_BLK - 1) // MAX_B_BLK
    return MAX_B_BLK, n_blocks


def _lstm_call(b_blk, n_blocks):
    return pl.pallas_call(
        lstm_kernel,
        out_shape=jax.ShapeDtypeStruct((n_blocks * b_blk, G_LANES), jnp.float32),
        grid=(n_blocks,),
        in_specs=[
            pl.BlockSpec((b_blk, N_STEPS), lambda i: (i, 0)),      # x
            pl.BlockSpec((P_ROWS, G_LANES), lambda i: (0, 0)),     # packed params
        ],
        out_specs=pl.BlockSpec((b_blk, G_LANES), lambda i: (i, 0)),
        compiler_params=pltpu.CompilerParams(
            dimension_semantics=("parallel",)),   # shards batch blocks across TCs (v7x)
    )


def make_lstm_predict(params):
    """Pack + upload weights once; return a jitted predict(x) -> (B, NUM_CLASSES)."""
    p_tile = jnp.asarray(pack_params(params))     # (8, 128), device-resident

    @partial(jax.jit, static_argnames=("b_blk", "n_blocks"))
    def _predict(x, p, *, b_blk, n_blocks):
        B = x.shape[0]
        b_pad = b_blk * n_blocks
        x2d = x.astype(jnp.float32).reshape(B, N_STEPS)            # (B, T)
        x2d = jnp.pad(x2d, ((0, b_pad - B), (0, 0)))               # (b_pad, T)
        out = _lstm_call(b_blk, n_blocks)(x2d, p)                  # (b_pad, 128)
        return out[:B, :NUM_CLASSES]

    def predict(x):
        assert x.ndim == 3 and x.shape[1] == N_STEPS and x.shape[2] == INPUT_SIZE
        b_blk, n_blocks = _choose_blocks(x.shape[0])
        return _predict(x, p_tile, b_blk=b_blk, n_blocks=n_blocks)

    return predict


def lstm_predict_ref(x, params):
    """Pure-numpy reference reproducing torch.nn.LSTM (i,f,g,o order) + Linear."""
    w_ih, w_hh, b_ih, b_hh, w_fc, b_fc = params
    x = np.asarray(x, np.float32)
    B = x.shape[0]
    h = np.zeros((B, HIDDEN_SIZE), np.float32)
    c = np.zeros((B, HIDDEN_SIZE), np.float32)
    sig = lambda v: 1.0 / (1.0 + np.exp(-v))
    for t in range(N_STEPS):
        gates = x[:, t, :] @ w_ih.T + h @ w_hh.T + b_ih + b_hh  # (B, 4H)
        i = sig(gates[:, 0 * HIDDEN_SIZE:1 * HIDDEN_SIZE])
        f = sig(gates[:, 1 * HIDDEN_SIZE:2 * HIDDEN_SIZE])
        g = np.tanh(gates[:, 2 * HIDDEN_SIZE:3 * HIDDEN_SIZE])
        o = sig(gates[:, 3 * HIDDEN_SIZE:4 * HIDDEN_SIZE])
        c = f * c + i * g
        h = o * np.tanh(c)
    return h @ w_fc.T + b_fc


def make_params(key):
    """Deterministic init, same shapes / uniform(-1/sqrt(H), 1/sqrt(H)) as PyTorch."""
    k = 1.0 / np.sqrt(HIDDEN_SIZE)
    keys = jax.random.split(key, 6)
    u = lambda kk, shape: np.asarray(
        jax.random.uniform(kk, shape, jnp.float32, minval=-k, maxval=k))
    w_ih = u(keys[0], (4 * HIDDEN_SIZE, INPUT_SIZE))
    w_hh = u(keys[1], (4 * HIDDEN_SIZE, HIDDEN_SIZE))
    b_ih = u(keys[2], (4 * HIDDEN_SIZE,))
    b_hh = u(keys[3], (4 * HIDDEN_SIZE,))
    w_fc = u(keys[4], (NUM_CLASSES, HIDDEN_SIZE))
    b_fc = u(keys[5], (NUM_CLASSES,))
    return (w_ih, w_hh, b_ih, b_hh, w_fc, b_fc)


if __name__ == "__main__":
    key = jax.random.PRNGKey(0)
    pkey, xkey = jax.random.split(key)
    params = make_params(pkey)

    B = 2  # small batch
    x = jax.random.normal(xkey, (B, N_STEPS, INPUT_SIZE), jnp.float32)

    predict = make_lstm_predict(params)
    out = jax.block_until_ready(predict(x))

    ref = lstm_predict_ref(np.asarray(x), params)
    np.testing.assert_allclose(np.asarray(out), ref, rtol=1e-4, atol=1e-5)

    print("KERNEL_OK")
</pallas_src>

<mosaic_0001>
module attributes {stable_mosaic.version = 11 : i64} {
  func.func @lstm_kernel(%arg0: i32, %arg1: memref<8x4xf32, #tpu.memory_space<vmem>>, %arg2: memref<8x128xf32, #tpu.memory_space<vmem>>, %arg3: memref<8x128xf32, #tpu.memory_space<vmem>>) attributes {dimension_semantics = [#tpu.dimension_semantics<parallel>], iteration_bounds = array<i64: 1>, scalar_prefetch = 0 : i64, scratch_operands = 0 : i64, tpu.core_type = #tpu.core_type<tc>, window_params = [{transform_indices = @transform_0, window_bounds = array<i64: 8, 4>}, {pipeline_mode = #tpu.pipeline_mode<synchronous>, transform_indices = @transform_1, window_bounds = array<i64: 8, 128>}, {transform_indices = @transform_2, window_bounds = array<i64: 8, 128>}]} {
    %c0 = arith.constant 0 : index
    %c0_0 = arith.constant 0 : index
    %0 = vector.load %arg2[%c0, %c0_0] : memref<8x128xf32, #tpu.memory_space<vmem>>, vector<8x128xf32>
    %1 = vector.extract_strided_slice %0 {offsets = [0, 0], sizes = [1, 128], strides = [1, 1]} : vector<8x128xf32> to vector<1x128xf32>
    %2 = vector.extract_strided_slice %0 {offsets = [1, 0], sizes = [1, 128], strides = [1, 1]} : vector<8x128xf32> to vector<1x128xf32>
    %3 = vector.extract_strided_slice %0 {offsets = [2, 0], sizes = [1, 128], strides = [1, 1]} : vector<8x128xf32> to vector<1x128xf32>
    %4 = vector.extract_strided_slice %0 {offsets = [3, 0], sizes = [1, 128], strides = [1, 1]} : vector<8x128xf32> to vector<1x128xf32>
    %5 = vector.extract_strided_slice %0 {offsets = [4, 0], sizes = [1, 128], strides = [1, 1]} : vector<8x128xf32> to vector<1x128xf32>
    %6 = vector.extract_strided_slice %0 {offsets = [5, 0], sizes = [1, 128], strides = [1, 1]} : vector<8x128xf32> to vector<1x128xf32>
    %7 = vector.extract_strided_slice %0 {offsets = [6, 0], sizes = [1, 128], strides = [1, 1]} : vector<8x128xf32> to vector<1x128xf32>
    %8 = vector.extract_strided_slice %0 {offsets = [7, 0], sizes = [1, 128], strides = [1, 1]} : vector<8x128xf32> to vector<1x128xf32>
    %c0_1 = arith.constant 0 : index
    %c0_2 = arith.constant 0 : index
    %9 = vector.load %arg1[%c0_1, %c0_2] : memref<8x4xf32, #tpu.memory_space<vmem>>, vector<8x4xf32>
    %10 = vector.extract_strided_slice %9 {offsets = [0, 0], sizes = [8, 1], strides = [1, 1]} : vector<8x4xf32> to vector<8x1xf32>
    %11 = vector.broadcast %10 : vector<8x1xf32> to vector<8x128xf32>
    %12 = vector.broadcast %1 : vector<1x128xf32> to vector<8x128xf32>
    %13 = arith.mulf %11, %12 : vector<8x128xf32>
    %14 = vector.broadcast %2 : vector<1x128xf32> to vector<8x128xf32>
    %15 = arith.addf %13, %14 : vector<8x128xf32>
    %16 = vector.extract_strided_slice %9 {offsets = [0, 1], sizes = [8, 1], strides = [1, 1]} : vector<8x4xf32> to vector<8x1xf32>
    %17 = vector.broadcast %16 : vector<8x1xf32> to vector<8x128xf32>
    %18 = vector.broadcast %1 : vector<1x128xf32> to vector<8x128xf32>
    %19 = arith.mulf %17, %18 : vector<8x128xf32>
    %20 = vector.broadcast %2 : vector<1x128xf32> to vector<8x128xf32>
    %21 = arith.addf %19, %20 : vector<8x128xf32>
    %22 = vector.extract_strided_slice %9 {offsets = [0, 2], sizes = [8, 1], strides = [1, 1]} : vector<8x4xf32> to vector<8x1xf32>
    %23 = vector.broadcast %22 : vector<8x1xf32> to vector<8x128xf32>
    %24 = vector.broadcast %1 : vector<1x128xf32> to vector<8x128xf32>
    %25 = arith.mulf %23, %24 : vector<8x128xf32>
    %26 = vector.broadcast %2 : vector<1x128xf32> to vector<8x128xf32>
    %27 = arith.addf %25, %26 : vector<8x128xf32>
    %28 = vector.extract_strided_slice %9 {offsets = [0, 3], sizes = [8, 1], strides = [1, 1]} : vector<8x4xf32> to vector<8x1xf32>
    %29 = vector.broadcast %28 : vector<8x1xf32> to vector<8x128xf32>
    %30 = vector.broadcast %1 : vector<1x128xf32> to vector<8x128xf32>
    %31 = arith.mulf %29, %30 : vector<8x128xf32>
    %32 = vector.broadcast %2 : vector<1x128xf32> to vector<8x128xf32>
    %33 = arith.addf %31, %32 : vector<8x128xf32>
    %cst = arith.constant 0.000000e+00 : f32
    %34 = vector.broadcast %cst : f32 to vector<8x128xf32>
    %cst_3 = arith.constant 0.000000e+00 : f32
    %35 = vector.broadcast %cst_3 : f32 to vector<8x1xf32>
    %cst_4 = arith.constant 0.000000e+00 : f32
    %36 = vector.broadcast %cst_4 : f32 to vector<8x1xf32>
    %37 = vector.broadcast %35 : vector<8x1xf32> to vector<8x128xf32>
    %38 = vector.broadcast %3 : vector<1x128xf32> to vector<8x128xf32>
    %39 = arith.mulf %37, %38 : vector<8x128xf32>
    %40 = arith.addf %15, %39 : vector<8x128xf32>
    %41 = vector.broadcast %36 : vector<8x1xf32> to vector<8x128xf32>
    %42 = vector.broadcast %4 : vector<1x128xf32> to vector<8x128xf32>
    %43 = arith.mulf %41, %42 : vector<8x128xf32>
    %44 = arith.addf %40, %43 : vector<8x128xf32>
    %45 = math.tanh %44 : vector<8x128xf32>
    %46 = vector.broadcast %5 : vector<1x128xf32> to vector<8x128xf32>
    %47 = arith.mulf %45, %46 : vector<8x128xf32>
    %48 = vector.broadcast %6 : vector<1x128xf32> to vector<8x128xf32>
    %49 = arith.addf %47, %48 : vector<8x128xf32>
    %c96_i32 = arith.constant 96 : i32
    %50 = tpu.dynamic_rotate %49 by %c96_i32 dim 1 : vector<8x128xf32>, i32 -> vector<8x128xf32>
    %c64_i32 = arith.constant 64 : i32
    %51 = tpu.dynamic_rotate %49 by %c64_i32 dim 1 : vector<8x128xf32>, i32 -> vector<8x128xf32>
    %c32_i32 = arith.constant 32 : i32
    %52 = tpu.dynamic_rotate %49 by %c32_i32 dim 1 : vector<8x128xf32>, i32 -> vector<8x128xf32>
    %53 = arith.mulf %50, %34 : vector<8x128xf32>
    %54 = arith.mulf %49, %51 : vector<8x128xf32>
    %55 = arith.addf %53, %54 : vector<8x128xf32>
    %56 = math.tanh %55 : vector<8x128xf32>
    %57 = arith.mulf %52, %56 : vector<8x128xf32>
    %58 = vector.extract_strided_slice %57 {offsets = [0, 0], sizes = [8, 1], strides = [1, 1]} : vector<8x128xf32> to vector<8x1xf32>
    %59 = vector.extract_strided_slice %57 {offsets = [0, 1], sizes = [8, 1], strides = [1, 1]} : vector<8x128xf32> to vector<8x1xf32>
    %60 = vector.broadcast %58 : vector<8x1xf32> to vector<8x128xf32>
    %61 = vector.broadcast %3 : vector<1x128xf32> to vector<8x128xf32>
    %62 = arith.mulf %60, %61 : vector<8x128xf32>
    %63 = arith.addf %21, %62 : vector<8x128xf32>
    %64 = vector.broadcast %59 : vector<8x1xf32> to vector<8x128xf32>
    %65 = vector.broadcast %4 : vector<1x128xf32> to vector<8x128xf32>
    %66 = arith.mulf %64, %65 : vector<8x128xf32>
    %67 = arith.addf %63, %66 : vector<8x128xf32>
    %68 = math.tanh %67 : vector<8x128xf32>
    %69 = vector.broadcast %5 : vector<1x128xf32> to vector<8x128xf32>
    %70 = arith.mulf %68, %69 : vector<8x128xf32>
    %71 = vector.broadcast %6 : vector<1x128xf32> to vector<8x128xf32>
    %72 = arith.addf %70, %71 : vector<8x128xf32>
    %c96_i32_5 = arith.constant 96 : i32
    %73 = tpu.dynamic_rotate %72 by %c96_i32_5 dim 1 : vector<8x128xf32>, i32 -> vector<8x128xf32>
    %c64_i32_6 = arith.constant 64 : i32
    %74 = tpu.dynamic_rotate %72 by %c64_i32_6 dim 1 : vector<8x128xf32>, i32 -> vector<8x128xf32>
    %c32_i32_7 = arith.constant 32 : i32
    %75 = tpu.dynamic_rotate %72 by %c32_i32_7 dim 1 : vector<8x128xf32>, i32 -> vector<8x128xf32>
    %76 = arith.mulf %73, %55 : vector<8x128xf32>
    %77 = arith.mulf %72, %74 : vector<8x128xf32>
    %78 = arith.addf %76, %77 : vector<8x128xf32>
    %79 = math.tanh %78 : vector<8x128xf32>
    %80 = arith.mulf %75, %79 : vector<8x128xf32>
    %81 = vector.extract_strided_slice %80 {offsets = [0, 0], sizes = [8, 1], strides = [1, 1]} : vector<8x128xf32> to vector<8x1xf32>
    %82 = vector.extract_strided_slice %80 {offsets = [0, 1], sizes = [8, 1], strides = [1, 1]} : vector<8x128xf32> to vector<8x1xf32>
    %83 = vector.broadcast %81 : vector<8x1xf32> to vector<8x128xf32>
    %84 = vector.broadcast %3 : vector<1x128xf32> to vector<8x128xf32>
    %85 = arith.mulf %83, %84 : vector<8x128xf32>
    %86 = arith.addf %27, %85 : vector<8x128xf32>
    %87 = vector.broadcast %82 : vector<8x1xf32> to vector<8x128xf32>
    %88 = vector.broadcast %4 : vector<1x128xf32> to vector<8x128xf32>
    %89 = arith.mulf %87, %88 : vector<8x128xf32>
    %90 = arith.addf %86, %89 : vector<8x128xf32>
    %91 = math.tanh %90 : vector<8x128xf32>
    %92 = vector.broadcast %5 : vector<1x128xf32> to vector<8x128xf32>
    %93 = arith.mulf %91, %92 : vector<8x128xf32>
    %94 = vector.broadcast %6 : vector<1x128xf32> to vector<8x128xf32>
    %95 = arith.addf %93, %94 : vector<8x128xf32>
    %c96_i32_8 = arith.constant 96 : i32
    %96 = tpu.dynamic_rotate %95 by %c96_i32_8 dim 1 : vector<8x128xf32>, i32 -> vector<8x128xf32>
    %c64_i32_9 = arith.constant 64 : i32
    %97 = tpu.dynamic_rotate %95 by %c64_i32_9 dim 1 : vector<8x128xf32>, i32 -> vector<8x128xf32>
    %c32_i32_10 = arith.constant 32 : i32
    %98 = tpu.dynamic_rotate %95 by %c32_i32_10 dim 1 : vector<8x128xf32>, i32 -> vector<8x128xf32>
    %99 = arith.mulf %96, %78 : vector<8x128xf32>
    %100 = arith.mulf %95, %97 : vector<8x128xf32>
    %101 = arith.addf %99, %100 : vector<8x128xf32>
    %102 = math.tanh %101 : vector<8x128xf32>
    %103 = arith.mulf %98, %102 : vector<8x128xf32>
    %104 = vector.extract_strided_slice %103 {offsets = [0, 0], sizes = [8, 1], strides = [1, 1]} : vector<8x128xf32> to vector<8x1xf32>
    %105 = vector.extract_strided_slice %103 {offsets = [0, 1], sizes = [8, 1], strides = [1, 1]} : vector<8x128xf32> to vector<8x1xf32>
    %106 = vector.broadcast %104 : vector<8x1xf32> to vector<8x128xf32>
    %107 = vector.broadcast %3 : vector<1x128xf32> to vector<8x128xf32>
    %108 = arith.mulf %106, %107 : vector<8x128xf32>
    %109 = arith.addf %33, %108 : vector<8x128xf32>
    %110 = vector.broadcast %105 : vector<8x1xf32> to vector<8x128xf32>
    %111 = vector.broadcast %4 : vector<1x128xf32> to vector<8x128xf32>
    %112 = arith.mulf %110, %111 : vector<8x128xf32>
    %113 = arith.addf %109, %112 : vector<8x128xf32>
    %114 = math.tanh %113 : vector<8x128xf32>
    %115 = vector.broadcast %5 : vector<1x128xf32> to vector<8x128xf32>
    %116 = arith.mulf %114, %115 : vector<8x128xf32>
    %117 = vector.broadcast %6 : vector<1x128xf32> to vector<8x128xf32>
    %118 = arith.addf %116, %117 : vector<8x128xf32>
    %c96_i32_11 = arith.constant 96 : i32
    %119 = tpu.dynamic_rotate %118 by %c96_i32_11 dim 1 : vector<8x128xf32>, i32 -> vector<8x128xf32>
    %c64_i32_12 = arith.constant 64 : i32
    %120 = tpu.dynamic_rotate %118 by %c64_i32_12 dim 1 : vector<8x128xf32>, i32 -> vector<8x128xf32>
    %c32_i32_13 = arith.constant 32 : i32
    %121 = tpu.dynamic_rotate %118 by %c32_i32_13 dim 1 : vector<8x128xf32>, i32 -> vector<8x128xf32>
    %122 = arith.mulf %119, %101 : vector<8x128xf32>
    %123 = arith.mulf %118, %120 : vector<8x128xf32>
    %124 = arith.addf %122, %123 : vector<8x128xf32>
    %125 = math.tanh %124 : vector<8x128xf32>
    %126 = arith.mulf %121, %125 : vector<8x128xf32>
    %127 = vector.broadcast %7 : vector<1x128xf32> to vector<8x128xf32>
    %128 = arith.mulf %126, %127 : vector<8x128xf32>
    %cst_14 = arith.constant dense<0.000000e+00> : vector<8xf32>
    %129 = vector.multi_reduction <add>, %128, %cst_14 [1] : vector<8x128xf32> to vector<8xf32>
    %130 = vector.shape_cast %129 : vector<8xf32> to vector<8x1xf32>
    %131 = vector.broadcast %130 : vector<8x1xf32> to vector<8x128xf32>
    %132 = vector.broadcast %8 : vector<1x128xf32> to vector<8x128xf32>
    %133 = arith.addf %131, %132 : vector<8x128xf32>
    %c0_15 = arith.constant 0 : index
    %c0_16 = arith.constant 0 : index
    %134 = vector.load %arg3[%c0_15, %c0_16] : memref<8x128xf32, #tpu.memory_space<vmem>>, vector<8x128xf32>
    tpu.vector_store %arg3[%c0_15, %c0_16], %133 {strides = array<i32>} : memref<8x128xf32, #tpu.memory_space<vmem>>, vector<8x128xf32>,
    return
  }
  func.func @transform_0(%arg0: i32) -> (i32, i32) {
    %c0_i32 = arith.constant 0 : i32
    %c0_i32_0 = arith.constant 0 : i32
    return %arg0, %c0_i32 : i32, i32
  }
  func.func @transform_1(%arg0: i32) -> (i32, i32) {
    %c0_i32 = arith.constant 0 : i32
    %c0_i32_0 = arith.constant 0 : i32
    %c0_i32_1 = arith.constant 0 : i32
    return %c0_i32, %c0_i32_0 : i32, i32
  }
  func.func @transform_2(%arg0: i32) -> (i32, i32) {
    %c0_i32 = arith.constant 0 : i32
    %c0_i32_0 = arith.constant 0 : i32
    return %arg0, %c0_i32 : i32, i32
  }
}

</mosaic_0001>

<llo_original>
// kernel: _predict.1
$region0: #{_predict.1}
  #allocation0 [shape = 'u32[]', space=smem, size = 0x4, offset = 0x4, fixed_abs, tag = 'smem constant byte address 0x4 - core index']
  #allocation1 [shape = 'u32[144,128]{1,0:T(1,128)}', space=vmem, size = 0x12000, scoped, tag = 'internal scratch']
  %s0 = inlined_call_operand.vmem [shape: f32[8,4], index: 0, kind: input, shape index: {}]
  %s1 = inlined_call_operand.vmem [shape: f32[8,128], index: 1, kind: input, shape index: {}]
  %s2 = inlined_call_operand.vmem [shape: f32[8,128], index: 2, kind: output, shape index: {}]
  %s3 = sld [smem:[#allocation0]]
  $region18: #{_predict.1} parent=0
    _
  %s5 = ssub.s32 1, %s3
  %s6 = scalar_select 0, %s5, %s3
  // Predicated region
  $region2: #{_predict.1} parent=0 // pred_check
    _
  $region3: #{_predict.1} parent=0 // pred_check_branch
    %8 = sbr.rel (0) target = $region5
  $region4: #{_predict.1} parent=0 // pred_region
    _
  $region5: #{_predict.1} parent=0 // pred_fallthru
    _
  // Predicated region
  $region6: #{_predict.1} parent=0 // pred_check
    _
  $region7: #{_predict.1} parent=0 // pred_check_branch
    %10 = sbr.rel (0) target = $region9
  $region8: #{_predict.1} parent=0 // pred_region
    _
  $region9: #{_predict.1} parent=0 // pred_fallthru
    _
  %v11 = vld [vmem:[%s1] sm:$0xff]
  %v12 = vld [vmem:[%s0] sm:$0xff]
  %14 = vset.pattern.permute.xlu0 0
  %15 = vperm.xlu0 %14, %v12
  %v16 = vpop.permute.xlu0 %15
  %v18 = vlaneseq
  %v19 = vshrl.u32 %v18, 7
  %v20 = vsub.s32 0, %v19
  %v21 = vrot.slane %v11, %v20
  %v22 = vmul.f32 %v16, %v21
  %v23 = vlaneseq
  %v24 = vshrl.u32 %v23, 7
  %v25 = vsub.s32 1, %v24
  %v26 = vrot.slane %v11, %v25
  %v27 = vadd.f32 %v22, %v26
  %28 = vset.pattern.permute.xlu0 1
  %29 = vperm.xlu0 %28, %v12
  %v30 = vpop.permute.xlu0 %29
  %v32 = vmul.f32 %v30, %v21
  %v33 = vadd.f32 %v32, %v26
  %34 = vset.pattern.permute.xlu0 2
  %35 = vperm.xlu0 %34, %v12
  %v36 = vpop.permute.xlu0 %35
  %v38 = vmul.f32 %v36, %v21
  %v39 = vadd.f32 %v38, %v26
  %40 = vset.pattern.permute.xlu0 3
  %41 = vperm.xlu0 %40, %v12
  %v42 = vpop.permute.xlu0 %41
  %v44 = vmul.f32 %v42, %v21
  %v45 = vadd.f32 %v44, %v26
  %v46 = vlaneseq
  %v47 = vshrl.u32 %v46, 7
  %v48 = vsub.s32 2, %v47
  %v49 = vrot.slane %v11, %v48
  %v50 = vmul.f32 %v49, 0.0
  %v51 = vadd.f32 %v27, %v50
  %v52 = vlaneseq
  %v53 = vshrl.u32 %v52, 7
  %v54 = vsub.s32 3, %v53
  %v55 = vrot.slane %v11, %v54
  %v56 = vmul.f32 %v55, 0.0
  %v57 = vadd.f32 %v51, %v56
  %v58 = vtanh.pop %v57
  %v59 = vlaneseq
  %v60 = vshrl.u32 %v59, 7
  %v61 = vsub.s32 4, %v60
  %v62 = vrot.slane %v11, %v61
  %v63 = vmul.f32 %v58, %v62
  %v64 = vlaneseq
  %v65 = vshrl.u32 %v64, 7
  %v66 = vsub.s32 5, %v65
  %v67 = vrot.slane %v11, %v66
  %v68 = vadd.f32 %v63, %v67
  %69 = vrot.lane.b32.xlu0 %v68, 96
  %v70 = vpop.permute.xlu0 %69
  %71 = vrot.lane.b32.xlu0 %v68, 64
  %v72 = vpop.permute.xlu0 %71
  %73 = vrot.lane.b32.xlu0 %v68, 32
  %v74 = vpop.permute.xlu0 %73
  %v75 = vmul.f32 %v70, 0.0
  %v76 = vmul.f32 %v68, %v72
  %v77 = vadd.f32 %v75, %v76
  %v78 = vtanh.pop %v77
  %v79 = vmul.f32 %v74, %v78
  %81 = vset.pattern.permute.xlu0 0
  %82 = vperm.xlu0 %81, %v79
  %v83 = vpop.permute.xlu0 %82
  %v85 = vmul.f32 %v83, %v49
  %v86 = vadd.f32 %v33, %v85
  %87 = vset.pattern.permute.xlu0 1
  %88 = vperm.xlu0 %87, %v79
  %v89 = vpop.permute.xlu0 %88
  %v91 = vmul.f32 %v89, %v55
  %v92 = vadd.f32 %v86, %v91
  %v93 = vtanh.pop %v92
  %v94 = vmul.f32 %v93, %v62
  %v95 = vadd.f32 %v94, %v67
  %96 = vrot.lane.b32.xlu0 %v95, 96
  %v97 = vpop.permute.xlu0 %96
  %98 = vrot.lane.b32.xlu0 %v95, 64
  %v99 = vpop.permute.xlu0 %98
  %100 = vrot.lane.b32.xlu0 %v95, 32
  %v101 = vpop.permute.xlu0 %100
  %v102 = vmul.f32 %v97, %v77
  %v103 = vmul.f32 %v95, %v99
  %v104 = vadd.f32 %v102, %v103
  %v105 = vtanh.pop %v104
  %v106 = vmul.f32 %v101, %v105
  %108 = vset.pattern.permute.xlu0 0
  %109 = vperm.xlu0 %108, %v106
  %v110 = vpop.permute.xlu0 %109
  %v112 = vmul.f32 %v110, %v49
  %v113 = vadd.f32 %v39, %v112
  %114 = vset.pattern.permute.xlu0 1
  %115 = vperm.xlu0 %114, %v106
  %v116 = vpop.permute.xlu0 %115
  %v118 = vmul.f32 %v116, %v55
  %v119 = vadd.f32 %v113, %v118
  %v120 = vtanh.pop %v119
  %v121 = vmul.f32 %v120, %v62
  %v122 = vadd.f32 %v121, %v67
  %123 = vrot.lane.b32.xlu0 %v122, 96
  %v124 = vpop.permute.xlu0 %123
  %125 = vrot.lane.b32.xlu0 %v122, 64
  %v126 = vpop.permute.xlu0 %125
  %127 = vrot.lane.b32.xlu0 %v122, 32
  %v128 = vpop.permute.xlu0 %127
  %v129 = vmul.f32 %v124, %v104
  %v130 = vmul.f32 %v122, %v126
  %v131 = vadd.f32 %v129, %v130
  %v132 = vtanh.pop %v131
  %v133 = vmul.f32 %v128, %v132
  %135 = vset.pattern.permute.xlu0 0
  %136 = vperm.xlu0 %135, %v133
  %v137 = vpop.permute.xlu0 %136
  %v139 = vmul.f32 %v137, %v49
  %v140 = vadd.f32 %v45, %v139
  %141 = vset.pattern.permute.xlu0 1
  %142 = vperm.xlu0 %141, %v133
  %v143 = vpop.permute.xlu0 %142
  %v145 = vmul.f32 %v143, %v55
  %v146 = vadd.f32 %v140, %v145
  %v147 = vtanh.pop %v146
  %v148 = vmul.f32 %v147, %v62
  %v149 = vadd.f32 %v148, %v67
  %150 = vrot.lane.b32.xlu0 %v149, 96
  %v151 = vpop.permute.xlu0 %150
  %152 = vrot.lane.b32.xlu0 %v149, 64
  %v153 = vpop.permute.xlu0 %152
  %154 = vrot.lane.b32.xlu0 %v149, 32
  %v155 = vpop.permute.xlu0 %154
  %v156 = vmul.f32 %v151, %v131
  %v157 = vmul.f32 %v149, %v153
  %v158 = vadd.f32 %v156, %v157
  %v159 = vtanh.pop %v158
  %v160 = vmul.f32 %v155, %v159
  %v161 = vlaneseq
  %v162 = vshrl.u32 %v161, 7
  %v163 = vsub.s32 6, %v162
  %v164 = vrot.slane %v11, %v163
  %v165 = vmul.f32 %v160, %v164
  %166 = vadd.xlane.f32.xlu0 %v165
  %v167 = vpop.xlane.xlu0 %166
  %v168 = vlaneseq
  %v169 = vshrl.u32 %v168, 7
  %v170 = vsub.s32 7, %v169
  %v171 = vrot.slane %v11, %v170
  %v172 = vadd.f32 %v167, %v171
  %173 = vst [vmem:[%s2] sm:$0xff] %v172
  // Predicated region
  $region10: #{_predict.1} parent=0 // pred_check
    _
  $region11: #{_predict.1} parent=0 // pred_check_branch
    %175 = sbr.rel (0) target = $region13
  $region12: #{_predict.1} parent=0 // pred_region
    _
  $region13: #{_predict.1} parent=0 // pred_fallthru
    _
  // Predicated region
  $region14: #{_predict.1} parent=0 // pred_check
    _
  $region15: #{_predict.1} parent=0 // pred_check_branch
    %177 = sbr.rel (0) target = $region17
  $region16: #{_predict.1} parent=0 // pred_region
    _
  $region17: #{_predict.1} parent=0 // pred_fallthru
    _

</llo_original>
